<compile_context>
chip_gen: v7x
topology: tpu7x:2x2x1
jax: 0.10.0
libtpu: 0.0.40
codegen_flags: <defaults>
</compile_context>

<pallas_src>
import jax
import jax.numpy as jnp
from jax import lax
from jax.experimental import pallas as pl
from jax.experimental.pallas import tpu as pltpu


def _gelu_exact(x):
    # PyTorch F.gelu default: 0.5 * x * (1 + erf(x / sqrt(2)))
    return 0.5 * x * (1.0 + lax.erf(x * (1.0 / jnp.sqrt(2.0).astype(x.dtype))))


def _svdmamba_kernel(x_ref, w_in_ref, b_in_ref, w_out_ref, b_out_ref, o_ref):
    # x_ref:     (tm, d_model)       -- streamed row tile (channels NOT padded)
    # w_in_ref:  (d_model, d_pad)    -- used half of in_proj, N zero-padded
    # b_in_ref:  (1, d_pad)          -- zero-padded
    # w_out_ref: (d_pad, d_pad)      -- K and N zero-padded
    # b_out_ref: (1, d_pad)          -- zero-padded
    # o_ref:     (tm, d_pad)         -- lane-dense output tile
    x = x_ref[...]

    # in_proj restricted to the channels the module keeps.  Padded output
    # columns are exactly zero (zero weight cols + zero bias, gelu(0) = 0).
    h = jnp.dot(x, w_in_ref[...], preferred_element_type=jnp.float32)
    h = _gelu_exact(h + b_in_ref[...])

    # out_proj.  Padded rows/cols of w_out and padded bias entries are zero,
    # so padded output channels stay exactly zero and are sliced off outside.
    out = jnp.dot(h, w_out_ref[...], preferred_element_type=jnp.float32)
    out = out + b_out_ref[...]

    o_ref[...] = out.astype(o_ref.dtype)


def simple_svd_mamba_forward(x, w_in_t, b_in, w_out_t, b_out, *, tile_m=512):
    """x: (B, S, d_model) float32.  w_in_t: (d_model, 2*d_model) (transposed
    PyTorch weight), b_in: (2*d_model,), w_out_t: (d_model, d_model),
    b_out: (d_model,).  Returns (output (B, S, d_model), cache dict)."""
    B, S, d_model = x.shape
    M = B * S
    x2d = x.reshape(M, d_model)

    # Dead-half elision: only the first d_model output channels of in_proj
    # survive the slice in the module.
    w_in_used = w_in_t[:, :d_model]    # (d_model, d_model)
    b_in_used = b_in[:d_model]         # (d_model,)

    # Lane-dense channel padding (weights/biases only, never x): numerically
    # exact because every padded weight column/row and bias entry is zero.
    d_pad = pl.cdiv(d_model, 128) * 128
    pad_c = d_pad - d_model
    if pad_c:
        w_in_p = jnp.pad(w_in_used, ((0, 0), (0, pad_c)))       # (d_model, d_pad)
        b_in_p = jnp.pad(b_in_used, ((0, pad_c),))               # (d_pad,)
        w_out_p = jnp.pad(w_out_t, ((0, pad_c), (0, pad_c)))     # (d_pad, d_pad)
        b_out_p = jnp.pad(b_out, ((0, pad_c),))                  # (d_pad,)
    else:
        w_in_p, b_in_p, w_out_p, b_out_p = w_in_used, b_in_used, w_out_t, b_out
    b_in_p = b_in_p.reshape(1, d_pad)
    b_out_p = b_out_p.reshape(1, d_pad)

    # Row tiling.  No jnp.pad copy of x: Pallas masks the ragged trailing
    # block's out-of-bounds rows on the store.  For M > tile_m the grid has
    # >= 2 steps, so v7x's two TensorCores can split the "parallel" axis.
    if M <= tile_m:
        tm = M           # single full-extent block (tiny inputs)
    else:
        tm = tile_m      # 512-row tiles, 8-aligned
    grid = (pl.cdiv(M, tm),)

    # Explicit scoped-VMEM budget: double-buffered x/out tiles, single-
    # buffered resident weights, f32 intermediates, plus headroom.  Clamp to
    # v7x's 64 MiB physical VMEM so the same config works on all generations.
    itemsize = 4  # f32
    x_bufs = 2 * tm * d_model * itemsize
    o_bufs = 2 * tm * d_pad * itemsize
    w_bufs = (d_model * d_pad + d_pad * d_pad + 2 * d_pad) * itemsize
    interm = 2 * tm * d_pad * itemsize
    vmem_limit = min(64 << 20,
                     max(x_bufs + o_bufs + w_bufs + interm + (4 << 20), 16 << 20))

    # Advisory cost estimate (padded-N work, no M padding).
    flops = 2 * M * d_model * d_pad + 2 * M * d_pad * d_pad
    bytes_accessed = itemsize * (
        M * d_model + M * d_pad + d_model * d_pad + d_pad * d_pad + 2 * d_pad
    )
    cost = pl.CostEstimate(
        flops=flops, transcendentals=M * d_pad, bytes_accessed=bytes_accessed
    )

    def _run(single_buffer_weights):
        res_kwargs = (
            dict(pipeline_mode=pl.Buffered(1)) if single_buffer_weights else {}
        )
        return pl.pallas_call(
            _svdmamba_kernel,
            out_shape=jax.ShapeDtypeStruct((M, d_pad), x.dtype),
            grid=grid,
            in_specs=[
                pl.BlockSpec((tm, d_model), lambda i: (i, 0)),                 # x (streamed)
                pl.BlockSpec((d_model, d_pad), lambda i: (0, 0), **res_kwargs),  # w_in
                pl.BlockSpec((1, d_pad), lambda i: (0, 0), **res_kwargs),        # b_in
                pl.BlockSpec((d_pad, d_pad), lambda i: (0, 0), **res_kwargs),    # w_out
                pl.BlockSpec((1, d_pad), lambda i: (0, 0), **res_kwargs),        # b_out
            ],
            out_specs=pl.BlockSpec((tm, d_pad), lambda i: (i, 0)),
            compiler_params=pltpu.CompilerParams(
                dimension_semantics=("parallel",),
                vmem_limit_bytes=vmem_limit,
            ),
            cost_estimate=cost,
        )(x2d, w_in_p, b_in_p, w_out_p, b_out_p)

    try:
        out2d = _run(single_buffer_weights=True)
    except Exception:
        # Fallback for JAX builds where pipeline_mode=pl.Buffered(1) is not
        # supported on the top-level pallas_call pipeline.
        out2d = _run(single_buffer_weights=False)

    output = out2d[:, :d_model].reshape(B, S, d_model)
    # Cache handling is Python-side state in the module; only the tensor part
    # of _process_full_sequence's cache is reproduced here.
    cache = {"last_hidden": x[:, -1:, :]}
    return output, cache


def _reference_forward(x, w_in_t, b_in, w_out_t, b_out, d_model):
    x_proj = x @ w_in_t + b_in
    h = jax.nn.gelu(x_proj, approximate=False)[..., :d_model]
    return h @ w_out_t + b_out


if __name__ == "__main__":
    d_model = 32
    d_state = 16  # unused in the forward math, kept for parity with __init__
    B, S = 2, 8

    key = jax.random.PRNGKey(0)
    kx, k1, k2, k3, k4 = jax.random.split(key, 5)

    x = jax.random.normal(kx, (B, S, d_model), dtype=jnp.float32)

    # Deterministic parameter init (PyTorch Linear stores (out, in); we pass transposed).
    w_in = jax.random.normal(k1, (2 * d_model, d_model), dtype=jnp.float32) * 0.05
    b_in = jax.random.normal(k2, (2 * d_model,), dtype=jnp.float32) * 0.05
    w_out = jax.random.normal(k3, (d_model, d_model), dtype=jnp.float32) * 0.05
    b_out = jax.random.normal(k4, (d_model,), dtype=jnp.float32) * 0.05

    w_in_t = w_in.T    # (d_model, 2*d_model)
    w_out_t = w_out.T  # (d_model, d_model)

    out, cache = simple_svd_mamba_forward(x, w_in_t, b_in, w_out_t, b_out)
    out = jax.block_until_ready(out)
    cache = jax.block_until_ready(cache)

    ref = _reference_forward(x, w_in_t, b_in, w_out_t, b_out, d_model)
    assert out.shape == (B, S, d_model)
    assert cache["last_hidden"].shape == (B, 1, d_model)
    assert jnp.allclose(out, ref, atol=1e-5, rtol=1e-5), "mismatch vs JAX reference"

    # Exercise the multi-tile path with a ragged trailing block
    # (M = 1200 -> grid of 3 tiles of 512 rows, last tile partial).
    B2, S2 = 4, 300
    x_big = jax.random.normal(jax.random.PRNGKey(1), (B2, S2, d_model), jnp.float32)
    out_big, _ = simple_svd_mamba_forward(x_big, w_in_t, b_in, w_out_t, b_out)
    out_big = jax.block_until_ready(out_big)
    ref_big = _reference_forward(x_big, w_in_t, b_in, w_out_t, b_out, d_model)
    assert jnp.allclose(out_big, ref_big, atol=1e-5, rtol=1e-5), "mismatch (tiled path)"

    print("KERNEL_OK")
</pallas_src>

<mosaic_0001>
module attributes {stable_mosaic.version = 11 : i64} {
  func.func @_svdmamba_kernel(%arg0: i32, %arg1: memref<16x32xf32, #tpu.memory_space<vmem>>, %arg2: memref<32x128xf32, #tpu.memory_space<vmem>>, %arg3: memref<1x128xf32, #tpu.memory_space<vmem>>, %arg4: memref<128x128xf32, #tpu.memory_space<vmem>>, %arg5: memref<1x128xf32, #tpu.memory_space<vmem>>, %arg6: memref<16x128xf32, #tpu.memory_space<vmem>>) attributes {dimension_semantics = [#tpu.dimension_semantics<parallel>], iteration_bounds = array<i64: 1>, scalar_prefetch = 0 : i64, scratch_operands = 0 : i64, tpu.core_type = #tpu.core_type<tc>, window_params = [{transform_indices = @transform_0, window_bounds = array<i64: 16, 32>}, {pipeline_mode = #tpu.pipeline_mode<synchronous>, transform_indices = @transform_1, window_bounds = array<i64: 32, 128>}, {pipeline_mode = #tpu.pipeline_mode<synchronous>, transform_indices = @transform_2, window_bounds = array<i64: 1, 128>}, {pipeline_mode = #tpu.pipeline_mode<synchronous>, transform_indices = @transform_3, window_bounds = array<i64: 128, 128>}, {pipeline_mode = #tpu.pipeline_mode<synchronous>, transform_indices = @transform_4, window_bounds = array<i64: 1, 128>}, {transform_indices = @transform_5, window_bounds = array<i64: 16, 128>}]} {
    %c0 = arith.constant 0 : index
    %c0_0 = arith.constant 0 : index
    %0 = vector.load %arg1[%c0, %c0_0] : memref<16x32xf32, #tpu.memory_space<vmem>>, vector<16x32xf32>
    %c0_1 = arith.constant 0 : index
    %c0_2 = arith.constant 0 : index
    %1 = vector.load %arg2[%c0_1, %c0_2] : memref<32x128xf32, #tpu.memory_space<vmem>>, vector<32x128xf32>
    %cst = arith.constant dense<0.000000e+00> : vector<16x128xf32>
    %2 = tpu.matmul %0, %1, %cst {dimension_numbers = #tpu.dot_dimension_numbers<[1], [0], [0], [1], [0, 0, 1, 1], [], []>} : vector<16x32xf32>, vector<32x128xf32>, vector<16x128xf32> -> vector<16x128xf32>
    %c0_3 = arith.constant 0 : index
    %c0_4 = arith.constant 0 : index
    %3 = vector.load %arg3[%c0_3, %c0_4] : memref<1x128xf32, #tpu.memory_space<vmem>>, vector<1x128xf32>
    %4 = vector.broadcast %3 : vector<1x128xf32> to vector<16x128xf32>
    %5 = arith.addf %2, %4 : vector<16x128xf32>
    %cst_5 = arith.constant 5.000000e-01 : f32
    %6 = vector.broadcast %cst_5 : f32 to vector<16x128xf32>
    %7 = arith.mulf %6, %5 : vector<16x128xf32>
    %cst_6 = arith.constant 2.000000e+00 : f32
    %8 = math.sqrt %cst_6 : f32
    %cst_7 = arith.constant 1.000000e+00 : f32
    %9 = arith.divf %cst_7, %8 : f32
    %10 = vector.broadcast %9 : f32 to vector<16x128xf32>
    %11 = arith.mulf %5, %10 : vector<16x128xf32>
    %12 = math.erf %11 : vector<16x128xf32>
    %cst_8 = arith.constant 1.000000e+00 : f32
    %13 = vector.broadcast %cst_8 : f32 to vector<16x128xf32>
    %14 = arith.addf %13, %12 : vector<16x128xf32>
    %15 = arith.mulf %7, %14 : vector<16x128xf32>
    %c0_9 = arith.constant 0 : index
    %c0_10 = arith.constant 0 : index
    %16 = vector.load %arg4[%c0_9, %c0_10] : memref<128x128xf32, #tpu.memory_space<vmem>>, vector<128x128xf32>
    %cst_11 = arith.constant dense<0.000000e+00> : vector<16x128xf32>
    %17 = tpu.matmul %15, %16, %cst_11 {dimension_numbers = #tpu.dot_dimension_numbers<[1], [0], [0], [1], [0, 0, 1, 1], [], []>} : vector<16x128xf32>, vector<128x128xf32>, vector<16x128xf32> -> vector<16x128xf32>
    %c0_12 = arith.constant 0 : index
    %c0_13 = arith.constant 0 : index
    %18 = vector.load %arg5[%c0_12, %c0_13] : memref<1x128xf32, #tpu.memory_space<vmem>>, vector<1x128xf32>
    %19 = vector.broadcast %18 : vector<1x128xf32> to vector<16x128xf32>
    %20 = arith.addf %17, %19 : vector<16x128xf32>
    %c0_14 = arith.constant 0 : index
    %c0_15 = arith.constant 0 : index
    %21 = vector.load %arg6[%c0_14, %c0_15] : memref<16x128xf32, #tpu.memory_space<vmem>>, vector<16x128xf32>
    tpu.vector_store %arg6[%c0_14, %c0_15], %20 {strides = array<i32>} : memref<16x128xf32, #tpu.memory_space<vmem>>, vector<16x128xf32>,
    return
  }
  func.func @transform_0(%arg0: i32) -> (i32, i32) {
    %c0_i32 = arith.constant 0 : i32
    %c0_i32_0 = arith.constant 0 : i32
    return %arg0, %c0_i32 : i32, i32
  }
  func.func @transform_1(%arg0: i32) -> (i32, i32) {
    %c0_i32 = arith.constant 0 : i32
    %c0_i32_0 = arith.constant 0 : i32
    %c0_i32_1 = arith.constant 0 : i32
    return %c0_i32, %c0_i32_0 : i32, i32
  }
  func.func @transform_2(%arg0: i32) -> (i32, i32) {
    %c0_i32 = arith.constant 0 : i32
    %c0_i32_0 = arith.constant 0 : i32
    %c0_i32_1 = arith.constant 0 : i32
    return %c0_i32, %c0_i32_0 : i32, i32
  }
  func.func @transform_3(%arg0: i32) -> (i32, i32) {
    %c0_i32 = arith.constant 0 : i32
    %c0_i32_0 = arith.constant 0 : i32
    %c0_i32_1 = arith.constant 0 : i32
    return %c0_i32, %c0_i32_0 : i32, i32
  }
  func.func @transform_4(%arg0: i32) -> (i32, i32) {
    %c0_i32 = arith.constant 0 : i32
    %c0_i32_0 = arith.constant 0 : i32
    %c0_i32_1 = arith.constant 0 : i32
    return %c0_i32, %c0_i32_0 : i32, i32
  }
  func.func @transform_5(%arg0: i32) -> (i32, i32) {
    %c0_i32 = arith.constant 0 : i32
    %c0_i32_0 = arith.constant 0 : i32
    return %arg0, %c0_i32 : i32, i32
  }
}

module attributes {stable_mosaic.version = 11 : i64} {
  func.func @_svdmamba_kernel(%arg0: i32, %arg1: memref<16x32xf32, #tpu.memory_space<vmem>>, %arg2: memref<32x128xf32, #tpu.memory_space<vmem>>, %arg3: memref<1x128xf32, #tpu.memory_space<vmem>>, %arg4: memref<128x128xf32, #tpu.memory_space<vmem>>, %arg5: memref<1x128xf32, #tpu.memory_space<vmem>>, %arg6: memref<16x128xf32, #tpu.memory_space<vmem>>) attributes {dimension_semantics = [#tpu.dimension_semantics<parallel>], iteration_bounds = array<i64: 1>, scalar_prefetch = 0 : i64, scratch_operands = 0 : i64, tpu.core_type = #tpu.core_type<tc>, window_params = [{transform_indices = @transform_0, window_bounds = array<i64: 16, 32>}, {pipeline_mode = #tpu.pipeline_mode<synchronous>, transform_indices = @transform_1, window_bounds = array<i64: 32, 128>}, {pipeline_mode = #tpu.pipeline_mode<synchronous>, transform_indices = @transform_2, window_bounds = array<i64: 1, 128>}, {pipeline_mode = #tpu.pipeline_mode<synchronous>, transform_indices = @transform_3, window_bounds = array<i64: 128, 128>}, {pipeline_mode = #tpu.pipeline_mode<synchronous>, transform_indices = @transform_4, window_bounds = array<i64: 1, 128>}, {transform_indices = @transform_5, window_bounds = array<i64: 16, 128>}]} {
    %c0 = arith.constant 0 : index
    %c0_0 = arith.constant 0 : index
    %0 = vector.load %arg1[%c0, %c0_0] : memref<16x32xf32, #tpu.memory_space<vmem>>, vector<16x32xf32>
    %c0_1 = arith.constant 0 : index
    %c0_2 = arith.constant 0 : index
    %1 = vector.load %arg2[%c0_1, %c0_2] : memref<32x128xf32, #tpu.memory_space<vmem>>, vector<32x128xf32>
    %cst = arith.constant dense<0.000000e+00> : vector<16x128xf32>
    %2 = tpu.matmul %0, %1, %cst {dimension_numbers = #tpu.dot_dimension_numbers<[1], [0], [0], [1], [0, 0, 1, 1], [], []>} : vector<16x32xf32>, vector<32x128xf32>, vector<16x128xf32> -> vector<16x128xf32>
    %c0_3 = arith.constant 0 : index
    %c0_4 = arith.constant 0 : index
    %3 = vector.load %arg3[%c0_3, %c0_4] : memref<1x128xf32, #tpu.memory_space<vmem>>, vector<1x128xf32>
    %4 = vector.broadcast %3 : vector<1x128xf32> to vector<16x128xf32>
    %5 = arith.addf %2, %4 : vector<16x128xf32>
    %cst_5 = arith.constant 5.000000e-01 : f32
    %6 = vector.broadcast %cst_5 : f32 to vector<16x128xf32>
    %7 = arith.mulf %6, %5 : vector<16x128xf32>
    %cst_6 = arith.constant 2.000000e+00 : f32
    %8 = math.sqrt %cst_6 : f32
    %cst_7 = arith.constant 1.000000e+00 : f32
    %9 = arith.divf %cst_7, %8 : f32
    %10 = vector.broadcast %9 : f32 to vector<16x128xf32>
    %11 = arith.mulf %5, %10 : vector<16x128xf32>
    %12 = math.erf %11 : vector<16x128xf32>
    %cst_8 = arith.constant 1.000000e+00 : f32
    %13 = vector.broadcast %cst_8 : f32 to vector<16x128xf32>
    %14 = arith.addf %13, %12 : vector<16x128xf32>
    %15 = arith.mulf %7, %14 : vector<16x128xf32>
    %c0_9 = arith.constant 0 : index
    %c0_10 = arith.constant 0 : index
    %16 = vector.load %arg4[%c0_9, %c0_10] : memref<128x128xf32, #tpu.memory_space<vmem>>, vector<128x128xf32>
    %cst_11 = arith.constant dense<0.000000e+00> : vector<16x128xf32>
    %17 = tpu.matmul %15, %16, %cst_11 {dimension_numbers = #tpu.dot_dimension_numbers<[1], [0], [0], [1], [0, 0, 1, 1], [], []>} : vector<16x128xf32>, vector<128x128xf32>, vector<16x128xf32> -> vector<16x128xf32>
    %c0_12 = arith.constant 0 : index
    %c0_13 = arith.constant 0 : index
    %18 = vector.load %arg5[%c0_12, %c0_13] : memref<1x128xf32, #tpu.memory_space<vmem>>, vector<1x128xf32>
    %19 = vector.broadcast %18 : vector<1x128xf32> to vector<16x128xf32>
    %20 = arith.addf %17, %19 : vector<16x128xf32>
    %c0_14 = arith.constant 0 : index
    %c0_15 = arith.constant 0 : index
    %21 = vector.load %arg6[%c0_14, %c0_15] : memref<16x128xf32, #tpu.memory_space<vmem>>, vector<16x128xf32>
    tpu.vector_store %arg6[%c0_14, %c0_15], %20 {strides = array<i32>} : memref<16x128xf32, #tpu.memory_space<vmem>>, vector<16x128xf32>,
    return
  }
  func.func @transform_0(%arg0: i32) -> (i32, i32) {
    %c0_i32 = arith.constant 0 : i32
    %c0_i32_0 = arith.constant 0 : i32
    return %arg0, %c0_i32 : i32, i32
  }
  func.func @transform_1(%arg0: i32) -> (i32, i32) {
    %c0_i32 = arith.constant 0 : i32
    %c0_i32_0 = arith.constant 0 : i32
    %c0_i32_1 = arith.constant 0 : i32
    return %c0_i32, %c0_i32_0 : i32, i32
  }
  func.func @transform_2(%arg0: i32) -> (i32, i32) {
    %c0_i32 = arith.constant 0 : i32
    %c0_i32_0 = arith.constant 0 : i32
    %c0_i32_1 = arith.constant 0 : i32
    return %c0_i32, %c0_i32_0 : i32, i32
  }
  func.func @transform_3(%arg0: i32) -> (i32, i32) {
    %c0_i32 = arith.constant 0 : i32
    %c0_i32_0 = arith.constant 0 : i32
    %c0_i32_1 = arith.constant 0 : i32
    return %c0_i32, %c0_i32_0 : i32, i32
  }
  func.func @transform_4(%arg0: i32) -> (i32, i32) {
    %c0_i32 = arith.constant 0 : i32
    %c0_i32_0 = arith.constant 0 : i32
    %c0_i32_1 = arith.constant 0 : i32
    return %c0_i32, %c0_i32_0 : i32, i32
  }
  func.func @transform_5(%arg0: i32) -> (i32, i32) {
    %c0_i32 = arith.constant 0 : i32
    %c0_i32_0 = arith.constant 0 : i32
    return %arg0, %c0_i32 : i32, i32
  }
}

</mosaic_0001>

<llo_original>
// kernel: tpu_custom_call.1
$region0: #{tpu_custom_call.1}
  #allocation0 [shape = 'u32[]', space=smem, size = 0x4, offset = 0x4, fixed_abs, tag = 'smem constant byte address 0x4 - core index']
  #allocation1 [shape = 'u32[144,128]{1,0:T(1,128)}', space=vmem, size = 0x12000, scoped, tag = 'internal scratch']
  %s0 = inlined_call_operand.hbm [shape: f32[16,32], index: 0, kind: input, shape index: {}]
  %s1 = inlined_call_operand.hbm [shape: f32[32,128], index: 1, kind: input, shape index: {}]
  %s2 = inlined_call_operand.vmem [shape: f32[1,128], index: 2, kind: input, shape index: {}]
  %s3 = inlined_call_operand.hbm [shape: f32[128,128], index: 3, kind: input, shape index: {}]
  %s4 = inlined_call_operand.vmem [shape: f32[1,128], index: 4, kind: input, shape index: {}]
  %s5 = inlined_call_operand.hbm [shape: f32[16,128], index: 5, kind: output, shape index: {}]
  %s6 = sld [smem:[#allocation0]]
  $region42: #{tpu_custom_call.1} parent=0
    _
  %s8 = ssub.s32 1, %s6
  %s9 = scalar_select 0, %s8, %s6
  $region1: #{tpu_custom_call.1} parent=0
    #allocation2 [shape = 'u8[8192]{0}', space=vmem, size = 0x2000, scoped, tag = 'input window, operand 0, single buffered']
    #allocation3 [shape = 's32[1]{0}', space=sflag, size = 0x4, scoped, tag = 'scoped memory for tpu_custom_call.1']
    #allocation4 [shape = 's32[1]{0}', space=sflag, size = 0x4, scoped, tag = 'scoped memory for tpu_custom_call.1']
    #allocation5 [shape = 'u8[16384]{0}', space=vmem, size = 0x4000, scoped, tag = 'input window, operand 1, single buffered']
    #allocation6 [shape = 's32[1]{0}', space=sflag, size = 0x4, scoped, tag = 'scoped memory for tpu_custom_call.1']
    #allocation7 [shape = 'u8[65536]{0}', space=vmem, size = 0x10000, scoped, tag = 'input window, operand 3, single buffered']
    #allocation8 [shape = 'u8[8192]{0}', space=vmem, size = 0x2000, scoped, tag = 'output window, operand 0, single buffered']
    %10 = vsyncpa [#allocation3], 0
    %11 = vsyncpa [#allocation6], 0
    %12 = vsyncpa [#allocation4], 0
    // Predicated region
    $region2: #{tpu_custom_call.1} parent=1 // pred_check
      _
    $region3: #{tpu_custom_call.1} parent=1 // pred_check_branch
      %14 = sbr.rel (0) target = $region5
    $region4: #{tpu_custom_call.1} parent=1 // pred_region
      %s16 = ssub.s32 256, 256
      %17 = vsyncadd [#allocation3], %s16
      %s18 = sshll.u32 [#allocation2], 4
      %s19 = int_to_ptr.vmem [resolvable:$true] %s18
      %24 = dma.hbm_to_vmem [thread:$0]  %s0, 256, %s19, [#allocation3], 128, 128, 8
    $region5: #{tpu_custom_call.1} parent=1 // pred_fallthru
      _
    // Predicated region
    $region6: #{tpu_custom_call.1} parent=1 // pred_check
      _
    $region7: #{tpu_custom_call.1} parent=1 // pred_check_branch
      %26 = sbr.rel (0) target = $region9
    $region8: #{tpu_custom_call.1} parent=1 // pred_region
      %s28 = ssub.s32 512, 512
      %29 = vsyncadd [#allocation6], %s28
      %s30 = sshll.u32 [#allocation5], 4
      %s31 = int_to_ptr.vmem [resolvable:$true] %s30
      %36 = dma.hbm_to_vmem [thread:$0]  %s1, 512, %s31, [#allocation6], 128, 128, 8
    $region9: #{tpu_custom_call.1} parent=1 // pred_fallthru
      _
    // Predicated region
    $region10: #{tpu_custom_call.1} parent=1 // pred_check
      _
    $region11: #{tpu_custom_call.1} parent=1 // pred_check_branch
      %38 = sbr.rel (0) target = $region13
    $region12: #{tpu_custom_call.1} parent=1 // pred_region
      _
    $region13: #{tpu_custom_call.1} parent=1 // pred_fallthru
      _
    // Predicated region
    $region14: #{tpu_custom_call.1} parent=1 // pred_check
      _
    $region15: #{tpu_custom_call.1} parent=1 // pred_check_branch
      %40 = sbr.rel (0) target = $region17
    $region16: #{tpu_custom_call.1} parent=1 // pred_region
      %s42 = ssub.s32 2048, 2048
      %43 = vsyncadd [#allocation6], %s42
      %s44 = sshll.u32 [#allocation7], 4
      %s45 = int_to_ptr.vmem [resolvable:$true] %s44
      %50 = dma.hbm_to_vmem [thread:$0]  %s3, 2048, %s45, [#allocation6], 128, 128, 8
    $region17: #{tpu_custom_call.1} parent=1 // pred_fallthru
      _
    // Predicated region
    $region18: #{tpu_custom_call.1} parent=1 // pred_check
      _
    $region19: #{tpu_custom_call.1} parent=1 // pred_check_branch
      %52 = sbr.rel (0) target = $region21
    $region20: #{tpu_custom_call.1} parent=1 // pred_region
      _
    $region21: #{tpu_custom_call.1} parent=1 // pred_fallthru
      _
    // Predicated region
    $region22: #{tpu_custom_call.1} parent=1 // pred_check
      _
    $region23: #{tpu_custom_call.1} parent=1 // pred_check_branch
      %54 = sbr.rel (0) target = $region25
    $region24: #{tpu_custom_call.1} parent=1 // pred_region
      %55 = dma.done [#allocation3], 256
    $region25: #{tpu_custom_call.1} parent=1 // pred_fallthru
      _
    // Predicated region
    $region26: #{tpu_custom_call.1} parent=1 // pred_check
      _
    $region27: #{tpu_custom_call.1} parent=1 // pred_check_branch
      %57 = sbr.rel (0) target = $region29
    $region28: #{tpu_custom_call.1} parent=1 // pred_region
      %58 = dma.done [#allocation6], 512
    $region29: #{tpu_custom_call.1} parent=1 // pred_fallthru
      _
    // Predicated region
    $region30: #{tpu_custom_call.1} parent=1 // pred_check
      _
    $region31: #{tpu_custom_call.1} parent=1 // pred_check_branch
      %60 = sbr.rel (0) target = $region33
    $region32: #{tpu_custom_call.1} parent=1 // pred_region
      %61 = dma.done [#allocation6], 2048
    $region33: #{tpu_custom_call.1} parent=1 // pred_fallthru
      _
    %v62 = vld [vmem:[#allocation2] sm:$0xff]
    %v63 = vld [vmem:[#allocation2 + $0x8] sm:$0xff]
    %v64 = vld [vmem:[#allocation5] sm:$0xff]
    %v65 = vld [vmem:[#allocation5 + $0x8] sm:$0xff]
    %v66 = vld [vmem:[#allocation5 + $0x10] sm:$0xff]
    %v67 = vld [vmem:[#allocation5 + $0x18] sm:$0xff]
    %v68 = vld [vmem:[%s2] sm:$0x1]
    %v70 = vlaneseq
    %v71 = vshrl.u32 %v70, 7
    %v72 = vsub.s32 0, %v71
    %v73 = vrot.slane %v68, %v72
    %vm75 = vcmask 261120
    %v77 = vsel %vm75, %v62, 0
    %v80 = vsel %vm75, %v63, 0
    %82 = vmatprep.subr.mxu0 0.0
    %83 = vmatpush1.msra.mxu0 %v64
    %84 = vmatprep.subr.mxu0 0.0
    %85 = vmatpush1.msra.mxu0 %v65
    %86 = vmatprep.subr.mxu0 0.0
    %87 = vmatpush1.msra.mxu0 %v66
    %88 = vmatprep.subr.mxu0 0.0
    %89 = vmatpush1.msra.mxu0 %v67
    %90 = vmatprep.subr.mxu0 0.0
    %91 = vmatpush1.msra.mxu0 0.0
    %92 = vmatprep.subr.mxu0 0.0
    %93 = vmatpush1.msra.mxu0 0.0
    %94 = vmatprep.subr.mxu0 0.0
    %95 = vmatpush1.msra.mxu0 0.0
    %96 = vmatprep.subr.mxu0 0.0
    %97 = vmatpush1.msra.mxu0 0.0
    %98 = vmatprep.subr.mxu0 0.0
    %99 = vmatpush1.msra.mxu0 0.0
    %100 = vmatprep.subr.mxu0 0.0
    %101 = vmatpush1.msra.mxu0 0.0
    %102 = vmatprep.subr.mxu0 0.0
    %103 = vmatpush1.msra.mxu0 0.0
    %104 = vmatprep.subr.mxu0 0.0
    %105 = vmatpush1.msra.mxu0 0.0
    %106 = vmatprep.subr.mxu0 0.0
    %107 = vmatpush1.msra.mxu0 0.0
    %108 = vmatprep.subr.mxu0 0.0
    %109 = vmatpush1.msra.mxu0 0.0
    %110 = vmatprep.subr.mxu0 0.0
    %111 = vmatpush1.msra.mxu0 0.0
    %112 = vmatprep.subr.mxu0 0.0
    %113 = vmatpush1.msra.mxu0 0.0
    %114 = vmatprep.subr.mxu0 0.0
    %115 = vmatpush1.msra.mxu0 0.0
    %116 = vmatprep.subr.mxu0 0.0
    %117 = vmatpush1.msra.mxu0 0.0
    %118 = vmatprep.subr.mxu0 0.0
    %119 = vmatpush1.msra.mxu0 0.0
    %120 = vmatprep.subr.mxu0 0.0
    %121 = vmatpush1.msra.mxu0 0.0
    %122 = vmatprep.subr.mxu0 0.0
    %123 = vmatpush1.msra.mxu0 0.0
    %124 = vmatprep.subr.mxu0 0.0
    %125 = vmatpush1.msra.mxu0 0.0
    %126 = vmatprep.subr.mxu0 0.0
    %127 = vmatpush1.msra.mxu0 0.0
    %128 = vmatprep.subr.mxu0 0.0
    %129 = vmatpush1.msra.mxu0 0.0
    %130 = vmatprep.subr.mxu0 0.0
    %131 = vmatpush1.msra.mxu0 0.0
    %132 = vmatprep.subr.mxu0 0.0
    %133 = vmatpush1.msra.mxu0 0.0
    %134 = vmatprep.subr.mxu0 0.0
    %135 = vmatpush1.msra.mxu0 0.0
    %136 = vmatprep.subr.mxu0 0.0
    %137 = vmatpush1.msra.mxu0 0.0
    %138 = vmatprep.subr.mxu0 0.0
    %139 = vmatpush1.msra.mxu0 0.0
    %140 = vmatprep.subr.mxu0 0.0
    %141 = vmatpush1.msra.mxu0 0.0
    %142 = vmatprep.subr.mxu0 0.0
    %143 = vmatpush1.msra.mxu0 0.0
    %144 = vmatprep.subr.mxu0 0.0
    %145 = vmatpush1.msra.mxu0 0.0
    %146 = vmatprep.mubr.f32.mxu0 0.0
    %147 = vmatmul.mubr.f32.gmra.mrb[0].mxu0 %v77
    %v148 = vpop.f32.mrb[0].mxu0
    %v149 = vadd.f32 %v73, %v148
    %v150 = vpop.f32.mrb[0].mxu0
    %151 = vmatprep.mubr.f32.mxu0 0.0
    %152 = vmatmul.mubr.f32.gmra.mrb[0].mxu0 %v80
    %v153 = vpop.f32.mrb[0].mxu0
    %v154 = vadd.f32 %v73, %v153
    %v155 = vpop.f32.mrb[0].mxu0
    %156 = vdwg.mxu0
    %v157 = vmul.f32 %v149, 0.5
    %v158 = vmul.f32 %v154, 0.5
    %v159 = vmul.f32 %v149, 0.70710677
    %v160 = vmul.f32 %v154, 0.70710677
    %v161 = verf.f32.pop %v159
    %v162 = verf.f32.pop %v160
    %v163 = vadd.f32 %v161, 1.0
    %v164 = vadd.f32 %v162, 1.0
    %v165 = vmul.f32 %v157, %v163
    %v166 = vmul.f32 %v158, %v164
    %v167 = vld [vmem:[#allocation7] sm:$0xff]
    %v168 = vld [vmem:[#allocation7 + $0x8] sm:$0xff]
    %v169 = vld [vmem:[#allocation7 + $0x10] sm:$0xff]
    %v170 = vld [vmem:[#allocation7 + $0x18] sm:$0xff]
    %v171 = vld [vmem:[#allocation7 + $0x20] sm:$0xff]
    %v172 = vld [vmem:[#allocation7 + $0x28] sm:$0xff]
    %v173 = vld [vmem:[#allocation7 + $0x30] sm:$0xff]
    %v174 = vld [vmem:[#allocation7 + $0x38] sm:$0xff]
    %v175 = vld [vmem:[#allocation7 + $0x40] sm:$0xff]
    %v176 = vld [vmem:[#allocation7 + $0x48] sm:$0xff]
    %v177 = vld [vmem:[#allocation7 + $0x50] sm:$0xff]
    %v178 = vld [vmem:[#allocation7 + $0x58] sm:$0xff]
    %v179 = vld [vmem:[#allocation7 + $0x60] sm:$0xff]
    %v180 = vld [vmem:[#allocation7 + $0x68] sm:$0xff]
    %v181 = vld [vmem:[#allocation7 + $0x70] sm:$0xff]
    %v182 = vld [vmem:[#allocation7 + $0x78] sm:$0xff]
    %v183 = vld [vmem:[%s4] sm:$0x1]
    %v185 = vlaneseq
    %v186 = vshrl.u32 %v185, 7
    %v187 = vsub.s32 0, %v186
    %v188 = vrot.slane %v183, %v187
    %190 = vmatprep.subr.mxu0 0.0
    %191 = vmatpush1.msra.mxu0 %v167
    %192 = vmatprep.subr.mxu0 0.0
    %193 = vmatpush1.msra.mxu0 %v168
    %194 = vmatprep.subr.mxu0 0.0
    %195 = vmatpush1.msra.mxu0 %v169
    %196 = vmatprep.subr.mxu0 0.0
    %197 = vmatpush1.msra.mxu0 %v170
    %198 = vmatprep.subr.mxu0 0.0
    %199 = vmatpush1.msra.mxu0 %v171
    %200 = vmatprep.subr.mxu0 0.0
    %201 = vmatpush1.msra.mxu0 %v172
    %202 = vmatprep.subr.mxu0 0.0
    %203 = vmatpush1.msra.mxu0 %v173
    %204 = vmatprep.subr.mxu0 0.0
    %205 = vmatpush1.msra.mxu0 %v174
    %206 = vmatprep.subr.mxu0 0.0
    %207 = vmatpush1.msra.mxu0 %v175
    %208 = vmatprep.subr.mxu0 0.0
    %209 = vmatpush1.msra.mxu0 %v176
    %210 = vmatprep.subr.mxu0 0.0
    %211 = vmatpush1.msra.mxu0 %v177
    %212 = vmatprep.subr.mxu0 0.0
    %213 = vmatpush1.msra.mxu0 %v178
    %214 = vmatprep.subr.mxu0 0.0
    %215 = vmatpush1.msra.mxu0 %v179
    %216 = vmatprep.subr.mxu0 0.0
    %217 = vmatpush1.msra.mxu0 %v180
    %218 = vmatprep.subr.mxu0 0.0
    %219 = vmatpush1.msra.mxu0 %v181
    %220 = vmatprep.subr.mxu0 0.0
    %221 = vmatpush1.msra.mxu0 %v182
    %222 = vmatprep.subr.mxu0 0.0
    %223 = vmatpush1.msra.mxu0 0.0
    %224 = vmatprep.subr.mxu0 0.0
    %225 = vmatpush1.msra.mxu0 0.0
    %226 = vmatprep.subr.mxu0 0.0
    %227 = vmatpush1.msra.mxu0 0.0
    %228 = vmatprep.subr.mxu0 0.0
    %229 = vmatpush1.msra.mxu0 0.0
    %230 = vmatprep.subr.mxu0 0.0
    %231 = vmatpush1.msra.mxu0 0.0
    %232 = vmatprep.subr.mxu0 0.0
    %233 = vmatpush1.msra.mxu0 0.0
    %234 = vmatprep.subr.mxu0 0.0
    %235 = vmatpush1.msra.mxu0 0.0
    %236 = vmatprep.subr.mxu0 0.0
    %237 = vmatpush1.msra.mxu0 0.0
    %238 = vmatprep.subr.mxu0 0.0
    %239 = vmatpush1.msra.mxu0 0.0
    %240 = vmatprep.subr.mxu0 0.0
    %241 = vmatpush1.msra.mxu0 0.0
    %242 = vmatprep.subr.mxu0 0.0
    %243 = vmatpush1.msra.mxu0 0.0
    %244 = vmatprep.subr.mxu0 0.0
    %245 = vmatpush1.msra.mxu0 0.0
    %246 = vmatprep.subr.mxu0 0.0
    %247 = vmatpush1.msra.mxu0 0.0
    %248 = vmatprep.subr.mxu0 0.0
    %249 = vmatpush1.msra.mxu0 0.0
    %250 = vmatprep.subr.mxu0 0.0
    %251 = vmatpush1.msra.mxu0 0.0
    %252 = vmatprep.subr.mxu0 0.0
    %253 = vmatpush1.msra.mxu0 0.0
    %254 = vmatprep.mubr.f32.mxu0 0.0
    %255 = vmatmul.mubr.f32.gmra.mrb[0].mxu0 %v165
    %v256 = vpop.f32.mrb[0].mxu0
    %v257 = vadd.f32 %v188, %v256
    %v258 = vpop.f32.mrb[0].mxu0
    %259 = vmatprep.mubr.f32.mxu0 0.0
    %260 = vmatmul.mubr.f32.gmra.mrb[0].mxu0 %v166
    %v261 = vpop.f32.mrb[0].mxu0
    %v262 = vadd.f32 %v188, %v261
    %v263 = vpop.f32.mrb[0].mxu0
    %264 = vdwg.mxu0
    %265 = vst [vmem:[#allocation8] sm:$0xff] %v257
    %266 = vst [vmem:[#allocation8 + $0x8] sm:$0xff] %v262
    // Predicated region
    $region34: #{tpu_custom_call.1} parent=1 // pred_check
      _
    $region35: #{tpu_custom_call.1} parent=1 // pred_check_branch
      %268 = sbr.rel (0) target = $region37
    $region36: #{tpu_custom_call.1} parent=1 // pred_region
      %s270 = ssub.s32 256, 256
      %271 = vsyncadd [#allocation4], %s270
      %s272 = sshll.u32 [#allocation8], 4
      %s273 = int_to_ptr.vmem [resolvable:$true] %s272
      %278 = dma.vmem_to_hbm [thread:$0]  %s273, 256, %s5, [#allocation4], 128, 128, 8
    $region37: #{tpu_custom_call.1} parent=1 // pred_fallthru
      _
    // Predicated region
    $region38: #{tpu_custom_call.1} parent=1 // pred_check
      _
    $region39: #{tpu_custom_call.1} parent=1 // pred_check_branch
      %280 = sbr.rel (0) target = $region41
    $region40: #{tpu_custom_call.1} parent=1 // pred_region
      %281 = dma.done [#allocation4], 256
    $region41: #{tpu_custom_call.1} parent=1 // pred_fallthru
      _
    %282 = vsyncpa [#allocation3], 1
    %283 = vsyncpa [#allocation6], 1
    %284 = vsyncpa [#allocation4], 1

// kernel: tpu_custom_call.1
$region0: #{tpu_custom_call.1}
  #allocation0 [shape = 'u32[]', space=smem, size = 0x4, offset = 0x4, fixed_abs, tag = 'smem constant byte address 0x4 - core index']
  #allocation1 [shape = 'u32[144,128]{1,0:T(1,128)}', space=vmem, size = 0x12000, scoped, tag = 'internal scratch']
  %s0 = inlined_call_operand.hbm [shape: f32[16,32], index: 0, kind: input, shape index: {}]
  %s1 = inlined_call_operand.hbm [shape: f32[32,128], index: 1, kind: input, shape index: {}]
  %s2 = inlined_call_operand.vmem [shape: f32[1,128], index: 2, kind: input, shape index: {}]
  %s3 = inlined_call_operand.hbm [shape: f32[128,128], index: 3, kind: input, shape index: {}]
  %s4 = inlined_call_operand.vmem [shape: f32[1,128], index: 4, kind: input, shape index: {}]
  %s5 = inlined_call_operand.hbm [shape: f32[16,128], index: 5, kind: output, shape index: {}]
  %s6 = sld [smem:[#allocation0]]
  $region42: #{tpu_custom_call.1} parent=0
    _
  %s8 = ssub.s32 1, %s6
  %s9 = scalar_select 0, %s8, %s6
  $region1: #{tpu_custom_call.1} parent=0
    #allocation2 [shape = 'u8[8192]{0}', space=vmem, size = 0x2000, scoped, tag = 'input window, operand 0, single buffered']
    #allocation3 [shape = 's32[1]{0}', space=sflag, size = 0x4, scoped, tag = 'scoped memory for tpu_custom_call.1']
    #allocation4 [shape = 's32[1]{0}', space=sflag, size = 0x4, scoped, tag = 'scoped memory for tpu_custom_call.1']
    #allocation5 [shape = 'u8[16384]{0}', space=vmem, size = 0x4000, scoped, tag = 'input window, operand 1, single buffered']
    #allocation6 [shape = 's32[1]{0}', space=sflag, size = 0x4, scoped, tag = 'scoped memory for tpu_custom_call.1']
    #allocation7 [shape = 'u8[65536]{0}', space=vmem, size = 0x10000, scoped, tag = 'input window, operand 3, single buffered']
    #allocation8 [shape = 'u8[8192]{0}', space=vmem, size = 0x2000, scoped, tag = 'output window, operand 0, single buffered']
    %10 = vsyncpa [#allocation3], 0
    %11 = vsyncpa [#allocation6], 0
    %12 = vsyncpa [#allocation4], 0
    // Predicated region
    $region2: #{tpu_custom_call.1} parent=1 // pred_check
      _
    $region3: #{tpu_custom_call.1} parent=1 // pred_check_branch
      %14 = sbr.rel (0) target = $region5
    $region4: #{tpu_custom_call.1} parent=1 // pred_region
      %s16 = ssub.s32 256, 256
      %17 = vsyncadd [#allocation3], %s16
      %s18 = sshll.u32 [#allocation2], 4
      %s19 = int_to_ptr.vmem [resolvable:$true] %s18
      %24 = dma.hbm_to_vmem [thread:$0]  %s0, 256, %s19, [#allocation3], 128, 128, 8
    $region5: #{tpu_custom_call.1} parent=1 // pred_fallthru
      _
    // Predicated region
    $region6: #{tpu_custom_call.1} parent=1 // pred_check
      _
    $region7: #{tpu_custom_call.1} parent=1 // pred_check_branch
      %26 = sbr.rel (0) target = $region9
    $region8: #{tpu_custom_call.1} parent=1 // pred_region
      %s28 = ssub.s32 512, 512
      %29 = vsyncadd [#allocation6], %s28
      %s30 = sshll.u32 [#allocation5], 4
      %s31 = int_to_ptr.vmem [resolvable:$true] %s30
      %36 = dma.hbm_to_vmem [thread:$0]  %s1, 512, %s31, [#allocation6], 128, 128, 8
    $region9: #{tpu_custom_call.1} parent=1 // pred_fallthru
      _
    // Predicated region
    $region10: #{tpu_custom_call.1} parent=1 // pred_check
      _
    $region11: #{tpu_custom_call.1} parent=1 // pred_check_branch
      %38 = sbr.rel (0) target = $region13
    $region12: #{tpu_custom_call.1} parent=1 // pred_region
      _
    $region13: #{tpu_custom_call.1} parent=1 // pred_fallthru
      _
    // Predicated region
    $region14: #{tpu_custom_call.1} parent=1 // pred_check
      _
    $region15: #{tpu_custom_call.1} parent=1 // pred_check_branch
      %40 = sbr.rel (0) target = $region17
    $region16: #{tpu_custom_call.1} parent=1 // pred_region
      %s42 = ssub.s32 2048, 2048
      %43 = vsyncadd [#allocation6], %s42
      %s44 = sshll.u32 [#allocation7], 4
      %s45 = int_to_ptr.vmem [resolvable:$true] %s44
      %50 = dma.hbm_to_vmem [thread:$0]  %s3, 2048, %s45, [#allocation6], 128, 128, 8
    $region17: #{tpu_custom_call.1} parent=1 // pred_fallthru
      _
    // Predicated region
    $region18: #{tpu_custom_call.1} parent=1 // pred_check
      _
    $region19: #{tpu_custom_call.1} parent=1 // pred_check_branch
      %52 = sbr.rel (0) target = $region21
    $region20: #{tpu_custom_call.1} parent=1 // pred_region
      _
    $region21: #{tpu_custom_call.1} parent=1 // pred_fallthru
      _
    // Predicated region
    $region22: #{tpu_custom_call.1} parent=1 // pred_check
      _
    $region23: #{tpu_custom_call.1} parent=1 // pred_check_branch
      %54 = sbr.rel (0) target = $region25
    $region24: #{tpu_custom_call.1} parent=1 // pred_region
      %55 = dma.done [#allocation3], 256
    $region25: #{tpu_custom_call.1} parent=1 // pred_fallthru
      _
    // Predicated region
    $region26: #{tpu_custom_call.1} parent=1 // pred_check
      _
    $region27: #{tpu_custom_call.1} parent=1 // pred_check_branch
      %57 = sbr.rel (0) target = $region29
    $region28: #{tpu_custom_call.1} parent=1 // pred_region
      %58 = dma.done [#allocation6], 512
    $region29: #{tpu_custom_call.1} parent=1 // pred_fallthru
      _
    // Predicated region
    $region30: #{tpu_custom_call.1} parent=1 // pred_check
      _
    $region31: #{tpu_custom_call.1} parent=1 // pred_check_branch
      %60 = sbr.rel (0) target = $region33
    $region32: #{tpu_custom_call.1} parent=1 // pred_region
      %61 = dma.done [#allocation6], 2048
    $region33: #{tpu_custom_call.1} parent=1 // pred_fallthru
      _
    %v62 = vld [vmem:[#allocation2] sm:$0xff]
    %v63 = vld [vmem:[#allocation2 + $0x8] sm:$0xff]
    %v64 = vld [vmem:[#allocation5] sm:$0xff]
    %v65 = vld [vmem:[#allocation5 + $0x8] sm:$0xff]
    %v66 = vld [vmem:[#allocation5 + $0x10] sm:$0xff]
    %v67 = vld [vmem:[#allocation5 + $0x18] sm:$0xff]
    %v68 = vld [vmem:[%s2] sm:$0x1]
    %v70 = vlaneseq
    %v71 = vshrl.u32 %v70, 7
    %v72 = vsub.s32 0, %v71
    %v73 = vrot.slane %v68, %v72
    %vm75 = vcmask 261120
    %v77 = vsel %vm75, %v62, 0
    %v80 = vsel %vm75, %v63, 0
    %82 = vmatprep.subr.mxu0 0.0
    %83 = vmatpush1.msra.mxu0 %v64
    %84 = vmatprep.subr.mxu0 0.0
    %85 = vmatpush1.msra.mxu0 %v65
    %86 = vmatprep.subr.mxu0 0.0
    %87 = vmatpush1.msra.mxu0 %v66
    %88 = vmatprep.subr.mxu0 0.0
    %89 = vmatpush1.msra.mxu0 %v67
    %90 = vmatprep.subr.mxu0 0.0
    %91 = vmatpush1.msra.mxu0 0.0
    %92 = vmatprep.subr.mxu0 0.0
    %93 = vmatpush1.msra.mxu0 0.0
    %94 = vmatprep.subr.mxu0 0.0
    %95 = vmatpush1.msra.mxu0 0.0
    %96 = vmatprep.subr.mxu0 0.0
    %97 = vmatpush1.msra.mxu0 0.0
    %98 = vmatprep.subr.mxu0 0.0
    %99 = vmatpush1.msra.mxu0 0.0
    %100 = vmatprep.subr.mxu0 0.0
    %101 = vmatpush1.msra.mxu0 0.0
    %102 = vmatprep.subr.mxu0 0.0
    %103 = vmatpush1.msra.mxu0 0.0
    %104 = vmatprep.subr.mxu0 0.0
    %105 = vmatpush1.msra.mxu0 0.0
    %106 = vmatprep.subr.mxu0 0.0
    %107 = vmatpush1.msra.mxu0 0.0
    %108 = vmatprep.subr.mxu0 0.0
    %109 = vmatpush1.msra.mxu0 0.0
    %110 = vmatprep.subr.mxu0 0.0
    %111 = vmatpush1.msra.mxu0 0.0
    %112 = vmatprep.subr.mxu0 0.0
    %113 = vmatpush1.msra.mxu0 0.0
    %114 = vmatprep.subr.mxu0 0.0
    %115 = vmatpush1.msra.mxu0 0.0
    %116 = vmatprep.subr.mxu0 0.0
    %117 = vmatpush1.msra.mxu0 0.0
    %118 = vmatprep.subr.mxu0 0.0
    %119 = vmatpush1.msra.mxu0 0.0
    %120 = vmatprep.subr.mxu0 0.0
    %121 = vmatpush1.msra.mxu0 0.0
    %122 = vmatprep.subr.mxu0 0.0
    %123 = vmatpush1.msra.mxu0 0.0
    %124 = vmatprep.subr.mxu0 0.0
    %125 = vmatpush1.msra.mxu0 0.0
    %126 = vmatprep.subr.mxu0 0.0
    %127 = vmatpush1.msra.mxu0 0.0
    %128 = vmatprep.subr.mxu0 0.0
    %129 = vmatpush1.msra.mxu0 0.0
    %130 = vmatprep.subr.mxu0 0.0
    %131 = vmatpush1.msra.mxu0 0.0
    %132 = vmatprep.subr.mxu0 0.0
    %133 = vmatpush1.msra.mxu0 0.0
    %134 = vmatprep.subr.mxu0 0.0
    %135 = vmatpush1.msra.mxu0 0.0
    %136 = vmatprep.subr.mxu0 0.0
    %137 = vmatpush1.msra.mxu0 0.0
    %138 = vmatprep.subr.mxu0 0.0
    %139 = vmatpush1.msra.mxu0 0.0
    %140 = vmatprep.subr.mxu0 0.0
    %141 = vmatpush1.msra.mxu0 0.0
    %142 = vmatprep.subr.mxu0 0.0
    %143 = vmatpush1.msra.mxu0 0.0
    %144 = vmatprep.subr.mxu0 0.0
    %145 = vmatpush1.msra.mxu0 0.0
    %146 = vmatprep.mubr.f32.mxu0 0.0
    %147 = vmatmul.mubr.f32.gmra.mrb[0].mxu0 %v77
    %v148 = vpop.f32.mrb[0].mxu0
    %v149 = vadd.f32 %v73, %v148
    %v150 = vpop.f32.mrb[0].mxu0
    %151 = vmatprep.mubr.f32.mxu0 0.0
    %152 = vmatmul.mubr.f32.gmra.mrb[0].mxu0 %v80
    %v153 = vpop.f32.mrb[0].mxu0
    %v154 = vadd.f32 %v73, %v153
    %v155 = vpop.f32.mrb[0].mxu0
    %156 = vdwg.mxu0
    %v157 = vmul.f32 %v149, 0.5
    %v158 = vmul.f32 %v154, 0.5
    %v159 = vmul.f32 %v149, 0.70710677
    %v160 = vmul.f32 %v154, 0.70710677
    %v161 = verf.f32.pop %v159
    %v162 = verf.f32.pop %v160
    %v163 = vadd.f32 %v161, 1.0
    %v164 = vadd.f32 %v162, 1.0
    %v165 = vmul.f32 %v157, %v163
    %v166 = vmul.f32 %v158, %v164
    %v167 = vld [vmem:[#allocation7] sm:$0xff]
    %v168 = vld [vmem:[#allocation7 + $0x8] sm:$0xff]
    %v169 = vld [vmem:[#allocation7 + $0x10] sm:$0xff]
    %v170 = vld [vmem:[#allocation7 + $0x18] sm:$0xff]
    %v171 = vld [vmem:[#allocation7 + $0x20] sm:$0xff]
    %v172 = vld [vmem:[#allocation7 + $0x28] sm:$0xff]
    %v173 = vld [vmem:[#allocation7 + $0x30] sm:$0xff]
    %v174 = vld [vmem:[#allocation7 + $0x38] sm:$0xff]
    %v175 = vld [vmem:[#allocation7 + $0x40] sm:$0xff]
    %v176 = vld [vmem:[#allocation7 + $0x48] sm:$0xff]
    %v177 = vld [vmem:[#allocation7 + $0x50] sm:$0xff]
    %v178 = vld [vmem:[#allocation7 + $0x58] sm:$0xff]
    %v179 = vld [vmem:[#allocation7 + $0x60] sm:$0xff]
    %v180 = vld [vmem:[#allocation7 + $0x68] sm:$0xff]
    %v181 = vld [vmem:[#allocation7 + $0x70] sm:$0xff]
    %v182 = vld [vmem:[#allocation7 + $0x78] sm:$0xff]
    %v183 = vld [vmem:[%s4] sm:$0x1]
    %v185 = vlaneseq
    %v186 = vshrl.u32 %v185, 7
    %v187 = vsub.s32 0, %v186
    %v188 = vrot.slane %v183, %v187
    %190 = vmatprep.subr.mxu0 0.0
    %191 = vmatpush1.msra.mxu0 %v167
    %192 = vmatprep.subr.mxu0 0.0
    %193 = vmatpush1.msra.mxu0 %v168
    %194 = vmatprep.subr.mxu0 0.0
    %195 = vmatpush1.msra.mxu0 %v169
    %196 = vmatprep.subr.mxu0 0.0
    %197 = vmatpush1.msra.mxu0 %v170
    %198 = vmatprep.subr.mxu0 0.0
    %199 = vmatpush1.msra.mxu0 %v171
    %200 = vmatprep.subr.mxu0 0.0
    %201 = vmatpush1.msra.mxu0 %v172
    %202 = vmatprep.subr.mxu0 0.0
    %203 = vmatpush1.msra.mxu0 %v173
    %204 = vmatprep.subr.mxu0 0.0
    %205 = vmatpush1.msra.mxu0 %v174
    %206 = vmatprep.subr.mxu0 0.0
    %207 = vmatpush1.msra.mxu0 %v175
    %208 = vmatprep.subr.mxu0 0.0
    %209 = vmatpush1.msra.mxu0 %v176
    %210 = vmatprep.subr.mxu0 0.0
    %211 = vmatpush1.msra.mxu0 %v177
    %212 = vmatprep.subr.mxu0 0.0
    %213 = vmatpush1.msra.mxu0 %v178
    %214 = vmatprep.subr.mxu0 0.0
    %215 = vmatpush1.msra.mxu0 %v179
    %216 = vmatprep.subr.mxu0 0.0
    %217 = vmatpush1.msra.mxu0 %v180
    %218 = vmatprep.subr.mxu0 0.0
    %219 = vmatpush1.msra.mxu0 %v181
    %220 = vmatprep.subr.mxu0 0.0
    %221 = vmatpush1.msra.mxu0 %v182
    %222 = vmatprep.subr.mxu0 0.0
    %223 = vmatpush1.msra.mxu0 0.0
    %224 = vmatprep.subr.mxu0 0.0
    %225 = vmatpush1.msra.mxu0 0.0
    %226 = vmatprep.subr.mxu0 0.0
    %227 = vmatpush1.msra.mxu0 0.0
    %228 = vmatprep.subr.mxu0 0.0
    %229 = vmatpush1.msra.mxu0 0.0
    %230 = vmatprep.subr.mxu0 0.0
    %231 = vmatpush1.msra.mxu0 0.0
    %232 = vmatprep.subr.mxu0 0.0
    %233 = vmatpush1.msra.mxu0 0.0
    %234 = vmatprep.subr.mxu0 0.0
    %235 = vmatpush1.msra.mxu0 0.0
    %236 = vmatprep.subr.mxu0 0.0
    %237 = vmatpush1.msra.mxu0 0.0
    %238 = vmatprep.subr.mxu0 0.0
    %239 = vmatpush1.msra.mxu0 0.0
    %240 = vmatprep.subr.mxu0 0.0
    %241 = vmatpush1.msra.mxu0 0.0
    %242 = vmatprep.subr.mxu0 0.0
    %243 = vmatpush1.msra.mxu0 0.0
    %244 = vmatprep.subr.mxu0 0.0
    %245 = vmatpush1.msra.mxu0 0.0
    %246 = vmatprep.subr.mxu0 0.0
    %247 = vmatpush1.msra.mxu0 0.0
    %248 = vmatprep.subr.mxu0 0.0
    %249 = vmatpush1.msra.mxu0 0.0
    %250 = vmatprep.subr.mxu0 0.0
    %251 = vmatpush1.msra.mxu0 0.0
    %252 = vmatprep.subr.mxu0 0.0
    %253 = vmatpush1.msra.mxu0 0.0
    %254 = vmatprep.mubr.f32.mxu0 0.0
    %255 = vmatmul.mubr.f32.gmra.mrb[0].mxu0 %v165
    %v256 = vpop.f32.mrb[0].mxu0
    %v257 = vadd.f32 %v188, %v256
    %v258 = vpop.f32.mrb[0].mxu0
    %259 = vmatprep.mubr.f32.mxu0 0.0
    %260 = vmatmul.mubr.f32.gmra.mrb[0].mxu0 %v166
    %v261 = vpop.f32.mrb[0].mxu0
    %v262 = vadd.f32 %v188, %v261
    %v263 = vpop.f32.mrb[0].mxu0
    %264 = vdwg.mxu0
    %265 = vst [vmem:[#allocation8] sm:$0xff] %v257
    %266 = vst [vmem:[#allocation8 + $0x8] sm:$0xff] %v262
    // Predicated region
    $region34: #{tpu_custom_call.1} parent=1 // pred_check
      _
    $region35: #{tpu_custom_call.1} parent=1 // pred_check_branch
      %268 = sbr.rel (0) target = $region37
    $region36: #{tpu_custom_call.1} parent=1 // pred_region
      %s270 = ssub.s32 256, 256
      %271 = vsyncadd [#allocation4], %s270
      %s272 = sshll.u32 [#allocation8], 4
      %s273 = int_to_ptr.vmem [resolvable:$true] %s272
      %278 = dma.vmem_to_hbm [thread:$0]  %s273, 256, %s5, [#allocation4], 128, 128, 8
    $region37: #{tpu_custom_call.1} parent=1 // pred_fallthru
      _
    // Predicated region
    $region38: #{tpu_custom_call.1} parent=1 // pred_check
      _
    $region39: #{tpu_custom_call.1} parent=1 // pred_check_branch
      %280 = sbr.rel (0) target = $region41
    $region40: #{tpu_custom_call.1} parent=1 // pred_region
      %281 = dma.done [#allocation4], 256
    $region41: #{tpu_custom_call.1} parent=1 // pred_fallthru
      _
    %282 = vsyncpa [#allocation3], 1
    %283 = vsyncpa [#allocation6], 1
    %284 = vsyncpa [#allocation4], 1

</llo_original>
